<compile_context>
chip_gen: v6e
topology: v6e:2x2x1
jax: 0.10.0
libtpu: 0.0.40
codegen_flags: <defaults>
</compile_context>

<pallas_src>
import functools

import jax
import jax.numpy as jnp
import numpy as np
from jax.experimental import pallas as pl
from jax.experimental.pallas import tpu as pltpu


def _focal_loss_kernel(preds_ref, targets_ref, weights_ref, focal_ref, *, gamma):
    # Cast AFTER the DMA so HBM traffic stays in the input dtype (e.g. bf16).
    logits = preds_ref[...].astype(jnp.float32)            # (BN, C) f32
    tgt = targets_ref[...]                                  # (BN, 1) int32
    w = weights_ref[...].astype(jnp.float32)                # (1,  C) f32
    bn, c = logits.shape

    # (1, C) lane iota broadcast against the (BN, 1) targets in the compare;
    # the select drops w[t] into the single "hot" lane of each row (replaces
    # the one-hot cast + two multiplies; no (BN, C) int32 temporary).
    col = jax.lax.broadcasted_iota(jnp.int32, (1, c), 1)    # (1, C)
    wsel = jnp.where(col == tgt, w, 0.0)                    # (BN, C) f32

    # Numerically stable softmax pieces; z is reused for both exp() and the
    # selected-logit term (one full-tile subtract instead of two).
    m = jnp.max(logits, axis=-1, keepdims=True)             # (BN, 1)
    z = logits - m                                           # (BN, C)
    s = jnp.sum(jnp.exp(z), axis=-1, keepdims=True)         # (BN, 1)

    w_t = jnp.sum(wsel, axis=-1, keepdims=True)             # (BN, 1) = w[t]
    wz_t = jnp.sum(wsel * z, axis=-1, keepdims=True)        # (BN, 1) = w[t]*(logit[t]-m)

    # ce = w[t] * (logsumexp(logits) - logit[t]) = w[t]*log(s) - w[t]*(logit[t]-m)
    ce = w_t * jnp.log(s) - wz_t                             # (BN, 1)

    # Focal modulation from the *weighted* CE (matches the PyTorch module).
    pt = jnp.exp(-ce)
    one_minus_pt = 1.0 - pt

    g = float(gamma)
    if g.is_integer() and 0 <= g <= 16:
        ig = int(g)
        if ig == 0:
            focal_term = jnp.ones_like(one_minus_pt)
        else:
            focal_term = one_minus_pt
            for _ in range(ig - 1):                          # pure VPU multiplies
                focal_term = focal_term * one_minus_pt
    else:
        focal_term = jnp.power(one_minus_pt, jnp.float32(g))

    focal_ref[...] = (focal_term * ce).astype(focal_ref.dtype)


def _choose_block_n(n, c, itemsize):
    """Row tile from a per-step VMEM byte budget (not a fixed row cap).

    Per tile row we pay roughly:
      * 2 * C * itemsize      double-buffered native-dtype logits block
      * 4 * C * 4             ~4 live (bn, C) f32 intermediates in the kernel
      * 2 * 2 * 128 * 4       lane-padded (bn, 1) targets + output column buffers
    A ~24 MiB budget keeps the total well under the 48 MiB scoped-VMEM limit
    (v7x has only 64 MiB per TensorCore) while making each pipeline step large
    enough to amortize the ~0.35 us per-step overhead on v5e/v6e.
    """
    budget = 24 * 1024 * 1024
    per_row = 2 * c * itemsize + 4 * c * 4 + 2 * 2 * 128 * 4
    bn = budget // max(1, per_row)
    bn = (int(max(8, min(16384, bn))) // 8) * 8

    n8 = -(-n // 8) * 8
    if bn >= n8:
        if n8 >= 16:
            # Split into >= 2 blocks so the "parallel" grid axis can feed both
            # TensorCores on v7x instead of leaving one idle.
            bn = ((n8 // 2 + 7) // 8) * 8
        else:
            bn = n8
    return bn


def focal_loss(preds, targets, class_weights=None, gamma=2.0, reduction='mean',
               block_n=None):
    """Pallas implementation of FocalLoss.forward.

    preds:   (N, C) logits, any float dtype (kept in native dtype for the DMA).
    targets: (N,) integer class ids.
    """
    if reduction not in ('none', 'mean', 'sum'):
        raise ValueError(f"Invalid reduction mode: {reduction}.")
    n, c = preds.shape

    if class_weights is None:
        w2 = jnp.ones((1, c), jnp.float32)
    else:
        w2 = jnp.asarray(class_weights, jnp.float32).reshape(1, c)

    itemsize = jnp.dtype(preds.dtype).itemsize
    if block_n is None:
        bn = _choose_block_n(n, c, itemsize)
    else:
        bn = max(8, (int(block_n) // 8) * 8)

    num_blocks = pl.cdiv(n, bn)

    # Targets as an (N, 1) int32 column so each row's class id sits on the
    # sublane axis next to its logits row.  No padding anywhere: the last grid
    # block over-hangs the arrays; its garbage rows are per-row independent and
    # their writeback is masked by Pallas.
    tgt2 = targets.astype(jnp.int32).reshape(n, 1)

    kernel = functools.partial(_focal_loss_kernel, gamma=float(gamma))

    focal = pl.pallas_call(
        kernel,
        out_shape=jax.ShapeDtypeStruct((n, 1), jnp.float32),
        grid=(num_blocks,),
        in_specs=[
            pl.BlockSpec((bn, c), lambda i: (i, 0)),   # logits tile (native dtype)
            pl.BlockSpec((bn, 1), lambda i: (i, 0)),   # targets tile
            pl.BlockSpec((1, c), lambda i: (0, 0)),    # class weights (reused)
        ],
        out_specs=pl.BlockSpec((bn, 1), lambda i: (i, 0)),
        compiler_params=pltpu.CompilerParams(
            dimension_semantics=("parallel",),          # no cross-tile state
            vmem_limit_bytes=48 * 1024 * 1024,
        ),
    )(preds, tgt2, w2)

    per_sample = focal[:, 0]                            # true N rows only
    if reduction == 'none':
        return per_sample
    if reduction == 'mean':
        return jnp.mean(per_sample)                     # divides by the true N
    return jnp.sum(per_sample)


def _focal_loss_ref(preds, targets, class_weights, gamma, reduction):
    """Pure-JAX reference mirroring the PyTorch module."""
    preds = preds.astype(jnp.float32)
    logp = jax.nn.log_softmax(preds, axis=-1)
    logp_t = jnp.take_along_axis(logp, targets[:, None].astype(jnp.int32), axis=-1)[:, 0]
    w_t = class_weights[targets]
    ce = -w_t * logp_t
    pt = jnp.exp(-ce)
    focal = (1.0 - pt) ** gamma * ce
    if reduction == 'none':
        return focal
    if reduction == 'mean':
        return jnp.mean(focal)
    return jnp.sum(focal)


if __name__ == "__main__":
    key = jax.random.PRNGKey(0)
    k1, k2, k3, k4, k5, k6 = jax.random.split(key, 6)

    ok = True

    # Case 1: tiny single-block problem (batch=8, classes=8), f32 logits.
    N, C = 8, 8
    preds = jax.random.normal(k1, (N, C), dtype=jnp.float32)
    targets = jax.random.randint(k2, (N,), 0, C, dtype=jnp.int32)
    class_weights = jnp.linspace(0.5, 2.0, C, dtype=jnp.float32)
    for reduction in ('mean', 'sum', 'none'):
        out = jax.block_until_ready(
            focal_loss(preds, targets, class_weights, gamma=2.0, reduction=reduction))
        ref = _focal_loss_ref(preds, targets, class_weights, 2.0, reduction)
        ok &= np.allclose(np.asarray(out), np.asarray(ref), rtol=1e-5, atol=1e-5)

    # Case 2: multi-tile grid with a ragged (over-hanging, unpadded) last block
    # (N=150, block_n=64 -> 3 blocks) and bf16 logits fed straight in.
    N2, C2 = 150, 16
    preds2 = jax.random.normal(k3, (N2, C2), dtype=jnp.float32).astype(jnp.bfloat16)
    targets2 = jax.random.randint(k4, (N2,), 0, C2, dtype=jnp.int32)
    weights2 = jnp.linspace(0.25, 1.75, C2, dtype=jnp.float32)
    preds2_f32 = preds2.astype(jnp.float32)
    for reduction in ('mean', 'sum', 'none'):
        out = jax.block_until_ready(
            focal_loss(preds2, targets2, weights2, gamma=2.0, reduction=reduction,
                       block_n=64))
        ref = _focal_loss_ref(preds2_f32, targets2, weights2, 2.0, reduction)
        ok &= np.allclose(np.asarray(out), np.asarray(ref), rtol=1e-4, atol=1e-4)

    # Case 3: no class weights + non-integer gamma (jnp.power fallback path).
    out = jax.block_until_ready(
        focal_loss(preds2, targets2, None, gamma=1.5, reduction='mean', block_n=64))
    ref = _focal_loss_ref(preds2_f32, targets2, jnp.ones((C2,), jnp.float32), 1.5, 'mean')
    ok &= np.allclose(np.asarray(out), np.asarray(ref), rtol=1e-4, atol=1e-4)

    # Case 4: automatic tile chooser -> splits into 2 blocks (keeps both TCs
    # busy on v7x) with a ragged second block; f32 logits, weighted, mean.
    N3, C3 = 300, 16
    preds3 = jax.random.normal(k5, (N3, C3), dtype=jnp.float32)
    targets3 = jax.random.randint(k6, (N3,), 0, C3, dtype=jnp.int32)
    weights3 = jnp.linspace(0.5, 1.5, C3, dtype=jnp.float32)
    for reduction in ('mean', 'none'):
        out = jax.block_until_ready(
            focal_loss(preds3, targets3, weights3, gamma=2.0, reduction=reduction))
        ref = _focal_loss_ref(preds3, targets3, weights3, 2.0, reduction)
        ok &= np.allclose(np.asarray(out), np.asarray(ref), rtol=1e-5, atol=1e-5)

    print("KERNEL_OK" if ok else "KERNEL_MISMATCH")
</pallas_src>

<mosaic_0001>
module attributes {stable_mosaic.version = 11 : i64} {
  func.func @_focal_loss_kernel(%arg0: i32, %arg1: memref<8x8xf32, #tpu.memory_space<vmem>>, %arg2: memref<8x1xi32, #tpu.memory_space<vmem>>, %arg3: memref<1x8xf32, #tpu.memory_space<vmem>>, %arg4: memref<8x1xf32, #tpu.memory_space<vmem>>) attributes {dimension_semantics = [#tpu.dimension_semantics<parallel>], iteration_bounds = array<i64: 1>, scalar_prefetch = 0 : i64, scratch_operands = 0 : i64, tpu.core_type = #tpu.core_type<tc>, window_params = [{transform_indices = @transform_0, window_bounds = array<i64: 8, 8>}, {transform_indices = @transform_1, window_bounds = array<i64: 8, 1>}, {pipeline_mode = #tpu.pipeline_mode<synchronous>, transform_indices = @transform_2, window_bounds = array<i64: 1, 8>}, {transform_indices = @transform_3, window_bounds = array<i64: 8, 1>}]} {
    %c0 = arith.constant 0 : index
    %c0_0 = arith.constant 0 : index
    %0 = vector.load %arg1[%c0, %c0_0] : memref<8x8xf32, #tpu.memory_space<vmem>>, vector<8x8xf32>
    %c0_1 = arith.constant 0 : index
    %c0_2 = arith.constant 0 : index
    %1 = vector.load %arg2[%c0_1, %c0_2] : memref<8x1xi32, #tpu.memory_space<vmem>>, vector<8x1xi32>
    %c0_3 = arith.constant 0 : index
    %c0_4 = arith.constant 0 : index
    %2 = vector.load %arg3[%c0_3, %c0_4] : memref<1x8xf32, #tpu.memory_space<vmem>>, vector<1x8xf32>
    %3 = tpu.iota {dimensions = array<i32: 1>} : vector<1x8xi32>
    %4 = vector.broadcast %3 : vector<1x8xi32> to vector<8x8xi32>
    %5 = vector.broadcast %1 : vector<8x1xi32> to vector<8x8xi32>
    %6 = arith.cmpi eq, %4, %5 : vector<8x8xi32>
    %cst = arith.constant 0.000000e+00 : f32
    %7 = vector.shape_cast %2 : vector<1x8xf32> to vector<1x8xf32>
    %8 = vector.broadcast %7 : vector<1x8xf32> to vector<8x8xf32>
    %9 = vector.broadcast %cst : f32 to vector<8x8xf32>
    %10 = arith.select %6, %8, %9 : vector<8x8xi1>, vector<8x8xf32>
    %cst_5 = arith.constant dense<0xFF800000> : vector<8xf32>
    %11 = vector.multi_reduction <maximumf>, %0, %cst_5 [1] : vector<8x8xf32> to vector<8xf32>
    %12 = vector.shape_cast %11 : vector<8xf32> to vector<8x1xf32>
    %13 = vector.broadcast %12 : vector<8x1xf32> to vector<8x8xf32>
    %14 = arith.subf %0, %13 : vector<8x8xf32>
    %15 = math.exp %14 : vector<8x8xf32>
    %cst_6 = arith.constant dense<0.000000e+00> : vector<8xf32>
    %16 = vector.multi_reduction <add>, %15, %cst_6 [1] : vector<8x8xf32> to vector<8xf32>
    %17 = vector.shape_cast %16 : vector<8xf32> to vector<8x1xf32>
    %cst_7 = arith.constant dense<0.000000e+00> : vector<8xf32>
    %18 = vector.multi_reduction <add>, %10, %cst_7 [1] : vector<8x8xf32> to vector<8xf32>
    %19 = vector.shape_cast %18 : vector<8xf32> to vector<8x1xf32>
    %20 = arith.mulf %10, %14 : vector<8x8xf32>
    %cst_8 = arith.constant dense<0.000000e+00> : vector<8xf32>
    %21 = vector.multi_reduction <add>, %20, %cst_8 [1] : vector<8x8xf32> to vector<8xf32>
    %22 = vector.shape_cast %21 : vector<8xf32> to vector<8x1xf32>
    %23 = math.log %17 : vector<8x1xf32>
    %24 = arith.mulf %19, %23 : vector<8x1xf32>
    %25 = arith.subf %24, %22 : vector<8x1xf32>
    %cst_9 = arith.constant 0.000000e+00 : f32
    %26 = vector.broadcast %cst_9 : f32 to vector<8x1xf32>
    %27 = arith.subf %26, %25 : vector<8x1xf32>
    %28 = math.exp %27 : vector<8x1xf32>
    %cst_10 = arith.constant 1.000000e+00 : f32
    %29 = vector.broadcast %cst_10 : f32 to vector<8x1xf32>
    %30 = arith.subf %29, %28 : vector<8x1xf32>
    %31 = arith.mulf %30, %30 : vector<8x1xf32>
    %32 = arith.mulf %31, %25 : vector<8x1xf32>
    %c0_11 = arith.constant 0 : index
    %c0_12 = arith.constant 0 : index
    %33 = vector.load %arg4[%c0_11, %c0_12] : memref<8x1xf32, #tpu.memory_space<vmem>>, vector<8x1xf32>
    tpu.vector_store %arg4[%c0_11, %c0_12], %32 {strides = array<i32>} : memref<8x1xf32, #tpu.memory_space<vmem>>, vector<8x1xf32>,
    return
  }
  func.func @transform_0(%arg0: i32) -> (i32, i32) {
    %c0_i32 = arith.constant 0 : i32
    %c0_i32_0 = arith.constant 0 : i32
    return %arg0, %c0_i32 : i32, i32
  }
  func.func @transform_1(%arg0: i32) -> (i32, i32) {
    %c0_i32 = arith.constant 0 : i32
    %c0_i32_0 = arith.constant 0 : i32
    return %arg0, %c0_i32 : i32, i32
  }
  func.func @transform_2(%arg0: i32) -> (i32, i32) {
    %c0_i32 = arith.constant 0 : i32
    %c0_i32_0 = arith.constant 0 : i32
    %c0_i32_1 = arith.constant 0 : i32
    return %c0_i32, %c0_i32_0 : i32, i32
  }
  func.func @transform_3(%arg0: i32) -> (i32, i32) {
    %c0_i32 = arith.constant 0 : i32
    %c0_i32_0 = arith.constant 0 : i32
    return %arg0, %c0_i32 : i32, i32
  }
}

</mosaic_0001>

<llo_original>
// kernel: tpu_custom_call.1
$region0: #{tpu_custom_call.1}
  #allocation0 [shape = 'u32[]', space=smem, size = 0x4, offset = 0x4, fixed_abs, tag = 'smem constant byte address 0x4 - core index']
  #allocation1 [shape = 'u32[144,128]{1,0:T(1,128)}', space=vmem, size = 0x12000, scoped, tag = 'internal scratch']
  %s0 = inlined_call_operand.vmem [shape: f32[8,8], index: 0, kind: input, shape index: {}]
  %s1 = inlined_call_operand.vmem [shape: s32[8,1], index: 1, kind: input, shape index: {}]
  %s2 = inlined_call_operand.vmem [shape: f32[1,8], index: 2, kind: input, shape index: {}]
  %s3 = inlined_call_operand.vmem [shape: f32[8,1], index: 3, kind: output, shape index: {}]
  %s4 = sld [smem:[#allocation0]]
  $region22: #{tpu_custom_call.1} parent=0
    _
  %s6 = ssub.s32 1, %s4
  %s7 = scalar_select 0, %s6, %s4
  // Predicated region
  $region2: #{tpu_custom_call.1} parent=0 // pred_check
    _
  $region3: #{tpu_custom_call.1} parent=0 // pred_check_branch
    %9 = sbr.rel (0) target = $region5
  $region4: #{tpu_custom_call.1} parent=0 // pred_region
    _
  $region5: #{tpu_custom_call.1} parent=0 // pred_fallthru
    _
  // Predicated region
  $region6: #{tpu_custom_call.1} parent=0 // pred_check
    _
  $region7: #{tpu_custom_call.1} parent=0 // pred_check_branch
    %11 = sbr.rel (0) target = $region9
  $region8: #{tpu_custom_call.1} parent=0 // pred_region
    _
  $region9: #{tpu_custom_call.1} parent=0 // pred_fallthru
    _
  // Predicated region
  $region10: #{tpu_custom_call.1} parent=0 // pred_check
    _
  $region11: #{tpu_custom_call.1} parent=0 // pred_check_branch
    %13 = sbr.rel (0) target = $region13
  $region12: #{tpu_custom_call.1} parent=0 // pred_region
    _
  $region13: #{tpu_custom_call.1} parent=0 // pred_fallthru
    _
  %v14 = vld [vmem:[%s0] sm:$0xff]
  %v15 = vld [vmem:[%s1] sm:$0xff]
  %v16 = vld [vmem:[%s2] sm:$0x1]
  %v17 = vlaneseq
  %v18 = vand.u32 %v17, 127
  %19 = vset.pattern.permute.xlu0 0
  %20 = vperm.xlu0 %19, %v15
  %v21 = vpop.permute.xlu0 %20
  %vm22 = vcmp.eq.s32.totalorder %v18, %v21
  %v24 = vlaneseq
  %v25 = vshrl.u32 %v24, 7
  %v26 = vsub.s32 0, %v25
  %v27 = vrot.slane %v16, %v26
  %v29 = vsel %vm22, %v27, 0.0
  %vm30 = vcmask 64512
  %v31 = vsel %vm30, %v14, -inf
  %32 = vmax.xlane.f32.xlu0 %v31
  %v33 = vpop.xlane.xlu0 %32
  %v34 = vsub.f32 %v14, %v33
  %v35 = vmul.f32 %v34, 1.442695
  %v36 = vpow.pop %v35
  %v37 = vsel %vm30, %v36, 0.0
  %38 = vadd.xlane.f32.xlu0 %v37
  %v39 = vpop.xlane.xlu0 %38
  %v40 = vsel %vm30, %v29, 0.0
  %41 = vadd.xlane.f32.xlu0 %v40
  %v42 = vpop.xlane.xlu0 %41
  %v43 = vmul.f32 %v29, %v34
  %v44 = vsel %vm30, %v43, 0.0
  %45 = vadd.xlane.f32.xlu0 %v44
  %v46 = vpop.xlane.xlu0 %45
  %v47 = vlog2.pop %v39
  %v48 = vmul.f32 %v47, 0.6931472
  %v49 = vmul.f32 %v42, %v48
  %v50 = vsub.f32 %v49, %v46
  %v51 = vsub.f32 0.0, %v50
  %v52 = vmul.f32 %v51, 1.442695
  %v53 = vpow.pop %v52
  %v54 = vsub.f32 1.0, %v53
  %v55 = vmul.f32 %v54, %v54
  %v56 = vmul.f32 %v55, %v50
  %vm57 = vcmask 7168
  %58 = vst.msk [vmem:[%s3] sm:$0xff] %vm57, %v56
  // Predicated region
  $region14: #{tpu_custom_call.1} parent=0 // pred_check
    _
  $region15: #{tpu_custom_call.1} parent=0 // pred_check_branch
    %60 = sbr.rel (0) target = $region17
  $region16: #{tpu_custom_call.1} parent=0 // pred_region
    _
  $region17: #{tpu_custom_call.1} parent=0 // pred_fallthru
    _
  // Predicated region
  $region18: #{tpu_custom_call.1} parent=0 // pred_check
    _
  $region19: #{tpu_custom_call.1} parent=0 // pred_check_branch
    %62 = sbr.rel (0) target = $region21
  $region20: #{tpu_custom_call.1} parent=0 // pred_region
    _
  $region21: #{tpu_custom_call.1} parent=0 // pred_fallthru
    _

</llo_original>
